<compile_context>
chip_gen: v7x
topology: tpu7x:2x2x1
jax: 0.10.0
libtpu: 0.0.40
codegen_flags: <defaults>
</compile_context>

<pallas_src>
import functools

import jax
import jax.numpy as jnp
from jax.experimental import pallas as pl
from jax.experimental.pallas import tpu as pltpu


def dqn_kernel(x_ref, w1_ref, b1_ref, w2_ref, b2_ref, w3_ref, b3_ref, o_ref):
    # One batch tile per grid step; weights/biases are pinned (constant index_map),
    # so they are DMA'd once and reused across every batch tile.
    h1 = jnp.dot(x_ref[...], w1_ref[...], preferred_element_type=jnp.float32)
    h1 = jnp.maximum(h1 + b1_ref[...], 0.0).astype(jnp.bfloat16)
    h2 = jnp.dot(h1, w2_ref[...], preferred_element_type=jnp.float32)
    h2 = jnp.maximum(h2 + b2_ref[...], 0.0).astype(jnp.bfloat16)
    o_ref[...] = (
        jnp.dot(h2, w3_ref[...], preferred_element_type=jnp.float32) + b3_ref[...]
    )


def _round_up(x, m):
    return ((x + m - 1) // m) * m


def _pick_batch_tile(B, batch_tile):
    B8 = _round_up(B, 8)  # sublane-friendly row count
    if B8 < 128:
        return B8  # too small to split usefully -> single grid step
    # >=2 tiles so the "parallel" batch axis shards across v7x's 2 TensorCores;
    # tiles capped at `batch_tile` (big tiles amortize per-step overhead on the
    # single-TensorCore v5e/v6e chips).
    tb = min(batch_tile, _round_up(pl.cdiv(B8, 2), 8))
    return max(tb, 64)


def prepare_params(w1, b1, w2, b2, w3, b3):
    """One-time prep (call at init / target-network sync, NOT per forward):
    bf16 weights (in, out) + f32 biases reshaped to (1, out)."""

    def prep(w, b):
        return w.astype(jnp.bfloat16), jnp.reshape(b, (1, -1)).astype(jnp.float32)

    w1, b1 = prep(w1, b1)
    w2, b2 = prep(w2, b2)
    w3, b3 = prep(w3, b3)
    return w1, b1, w2, b2, w3, b3


@functools.partial(jax.jit, static_argnames=("batch_tile",))
def dqn_forward(state, w1, b1, w2, b2, w3, b3, *, batch_tile=512):
    """Fused DQN forward. state: (B, S) f32; weights bf16 (in, out); biases f32 (1, out)."""
    B, S = state.shape
    H = w1.shape[1]
    A = w3.shape[1]

    TB = _pick_batch_tile(B, batch_tile)
    B_p = _round_up(B, TB)
    grid = (B_p // TB,)

    # Only the batch dim is padded (rows are independent; padded rows are dropped
    # by the final [:B] slice). Pad + bf16 cast fuse into one pass under jit.
    x = state
    if B_p != B:
        x = jnp.pad(x, ((0, B_p - B), (0, 0)))
    x = x.astype(jnp.bfloat16)

    flops = 2 * B_p * (S * H + H * H + H * A)
    w_bytes = (w1.size + w2.size + w3.size) * 2
    b_bytes = (b1.size + b2.size + b3.size) * 4
    bytes_accessed = x.size * 2 + w_bytes + b_bytes + B_p * A * 4

    # VMEM estimate: pinned weights/biases (worst case double-buffered) +
    # double-buffered streamed x/out tiles + f32 intermediates, with headroom.
    vmem_needed = (
        2 * (w_bytes + b_bytes)
        + 2 * (TB * S * 2 + TB * A * 4)
        + 4 * TB * H * 4
    )
    vmem_limit = int(min(max(2 * vmem_needed, 32 * 2**20), 100 * 2**20))

    out = pl.pallas_call(
        dqn_kernel,
        out_shape=jax.ShapeDtypeStruct((B_p, A), jnp.float32),
        grid_spec=pltpu.PrefetchScalarGridSpec(
            num_scalar_prefetch=0,
            grid=grid,
            in_specs=[
                pl.BlockSpec((TB, S), lambda i: (i, 0)),  # streamed state tile
                pl.BlockSpec((S, H), lambda i: (0, 0)),   # pinned weights/biases
                pl.BlockSpec((1, H), lambda i: (0, 0)),
                pl.BlockSpec((H, H), lambda i: (0, 0)),
                pl.BlockSpec((1, H), lambda i: (0, 0)),
                pl.BlockSpec((H, A), lambda i: (0, 0)),
                pl.BlockSpec((1, A), lambda i: (0, 0)),
            ],
            out_specs=pl.BlockSpec((TB, A), lambda i: (i, 0)),
        ),
        compiler_params=pltpu.CompilerParams(
            dimension_semantics=("parallel",),
            vmem_limit_bytes=vmem_limit,
        ),
        cost_estimate=pl.CostEstimate(
            flops=flops, transcendentals=0, bytes_accessed=bytes_accessed
        ),
    )(x, w1, b1, w2, b2, w3, b3)

    return out[:B]


def init_params(key, state_dim, hidden_dim, action_dim):
    # Deterministic init mimicking PyTorch Linear default (uniform +/- 1/sqrt(fan_in)).
    ks = jax.random.split(key, 6)

    def lin(kw, kb, fan_in, fan_out):
        bound = 1.0 / jnp.sqrt(fan_in)
        w = jax.random.uniform(kw, (fan_in, fan_out), jnp.float32, -bound, bound)
        b = jax.random.uniform(kb, (fan_out,), jnp.float32, -bound, bound)
        return w, b

    w1, b1 = lin(ks[0], ks[1], state_dim, hidden_dim)
    w2, b2 = lin(ks[2], ks[3], hidden_dim, hidden_dim)
    w3, b3 = lin(ks[4], ks[5], hidden_dim, action_dim)
    return w1, b1, w2, b2, w3, b3


if __name__ == "__main__":
    batch, state_dim, hidden_dim, action_dim = 2, 16, 32, 4

    key = jax.random.PRNGKey(0)
    k_params, k_state = jax.random.split(key)
    raw_params = init_params(k_params, state_dim, hidden_dim, action_dim)
    # One-time cast/reshape (at "network construction"), NOT on every forward.
    params = prepare_params(*raw_params)
    state = jax.random.normal(k_state, (batch, state_dim), jnp.float32)

    out = dqn_forward(state, *params)
    out = jax.block_until_ready(out)

    # Pure-JAX f32 reference. Tolerance loosened because the kernel uses bf16
    # weights/activations with f32 accumulation.
    w1, b1, w2, b2, w3, b3 = raw_params
    ref = jnp.maximum(state @ w1 + b1, 0.0)
    ref = jnp.maximum(ref @ w2 + b2, 0.0)
    ref = ref @ w3 + b3

    assert out.shape == (batch, action_dim)
    assert jnp.allclose(out, ref, atol=2e-2, rtol=2e-2), (
        f"max abs err {jnp.max(jnp.abs(out - ref))}"
    )

    print("KERNEL_OK")
</pallas_src>

<mosaic_0001>
module attributes {stable_mosaic.version = 11 : i64} {
  func.func @dqn_kernel(%arg0: i32, %arg1: memref<8x16xbf16, #tpu.memory_space<vmem>>, %arg2: memref<16x32xbf16, #tpu.memory_space<vmem>>, %arg3: memref<1x32xf32, #tpu.memory_space<vmem>>, %arg4: memref<32x32xbf16, #tpu.memory_space<vmem>>, %arg5: memref<1x32xf32, #tpu.memory_space<vmem>>, %arg6: memref<32x4xbf16, #tpu.memory_space<vmem>>, %arg7: memref<1x4xf32, #tpu.memory_space<vmem>>, %arg8: memref<8x4xf32, #tpu.memory_space<vmem>>) attributes {dimension_semantics = [#tpu.dimension_semantics<parallel>], iteration_bounds = array<i64: 1>, scalar_prefetch = 0 : i64, scratch_operands = 0 : i64, tpu.core_type = #tpu.core_type<tc>, window_params = [{transform_indices = @transform_0, window_bounds = array<i64: 8, 16>}, {pipeline_mode = #tpu.pipeline_mode<synchronous>, transform_indices = @transform_1, window_bounds = array<i64: 16, 32>}, {pipeline_mode = #tpu.pipeline_mode<synchronous>, transform_indices = @transform_2, window_bounds = array<i64: 1, 32>}, {pipeline_mode = #tpu.pipeline_mode<synchronous>, transform_indices = @transform_3, window_bounds = array<i64: 32, 32>}, {pipeline_mode = #tpu.pipeline_mode<synchronous>, transform_indices = @transform_4, window_bounds = array<i64: 1, 32>}, {pipeline_mode = #tpu.pipeline_mode<synchronous>, transform_indices = @transform_5, window_bounds = array<i64: 32, 4>}, {pipeline_mode = #tpu.pipeline_mode<synchronous>, transform_indices = @transform_6, window_bounds = array<i64: 1, 4>}, {transform_indices = @transform_7, window_bounds = array<i64: 8, 4>}]} {
    %c0 = arith.constant 0 : index
    %c0_0 = arith.constant 0 : index
    %0 = vector.load %arg1[%c0, %c0_0] : memref<8x16xbf16, #tpu.memory_space<vmem>>, vector<8x16xbf16>
    %c0_1 = arith.constant 0 : index
    %c0_2 = arith.constant 0 : index
    %1 = vector.load %arg2[%c0_1, %c0_2] : memref<16x32xbf16, #tpu.memory_space<vmem>>, vector<16x32xbf16>
    %cst = arith.constant dense<0.000000e+00> : vector<8x32xf32>
    %2 = tpu.matmul %0, %1, %cst {dimension_numbers = #tpu.dot_dimension_numbers<[1], [0], [0], [1], [0, 0, 1, 1], [], []>} : vector<8x16xbf16>, vector<16x32xbf16>, vector<8x32xf32> -> vector<8x32xf32>
    %c0_3 = arith.constant 0 : index
    %c0_4 = arith.constant 0 : index
    %3 = vector.load %arg3[%c0_3, %c0_4] : memref<1x32xf32, #tpu.memory_space<vmem>>, vector<1x32xf32>
    %4 = vector.broadcast %3 : vector<1x32xf32> to vector<8x32xf32>
    %5 = arith.addf %2, %4 : vector<8x32xf32>
    %cst_5 = arith.constant 0.000000e+00 : f32
    %6 = vector.broadcast %cst_5 : f32 to vector<8x32xf32>
    %7 = arith.maximumf %5, %6 : vector<8x32xf32>
    %8 = arith.truncf %7 : vector<8x32xf32> to vector<8x32xbf16>
    %c0_6 = arith.constant 0 : index
    %c0_7 = arith.constant 0 : index
    %9 = vector.load %arg4[%c0_6, %c0_7] : memref<32x32xbf16, #tpu.memory_space<vmem>>, vector<32x32xbf16>
    %cst_8 = arith.constant dense<0.000000e+00> : vector<8x32xf32>
    %10 = tpu.matmul %8, %9, %cst_8 {dimension_numbers = #tpu.dot_dimension_numbers<[1], [0], [0], [1], [0, 0, 1, 1], [], []>} : vector<8x32xbf16>, vector<32x32xbf16>, vector<8x32xf32> -> vector<8x32xf32>
    %c0_9 = arith.constant 0 : index
    %c0_10 = arith.constant 0 : index
    %11 = vector.load %arg5[%c0_9, %c0_10] : memref<1x32xf32, #tpu.memory_space<vmem>>, vector<1x32xf32>
    %12 = vector.broadcast %11 : vector<1x32xf32> to vector<8x32xf32>
    %13 = arith.addf %10, %12 : vector<8x32xf32>
    %cst_11 = arith.constant 0.000000e+00 : f32
    %14 = vector.broadcast %cst_11 : f32 to vector<8x32xf32>
    %15 = arith.maximumf %13, %14 : vector<8x32xf32>
    %16 = arith.truncf %15 : vector<8x32xf32> to vector<8x32xbf16>
    %c0_12 = arith.constant 0 : index
    %c0_13 = arith.constant 0 : index
    %17 = vector.load %arg6[%c0_12, %c0_13] : memref<32x4xbf16, #tpu.memory_space<vmem>>, vector<32x4xbf16>
    %cst_14 = arith.constant dense<0.000000e+00> : vector<8x4xf32>
    %18 = tpu.matmul %16, %17, %cst_14 {dimension_numbers = #tpu.dot_dimension_numbers<[1], [0], [0], [1], [0, 0, 1, 1], [], []>} : vector<8x32xbf16>, vector<32x4xbf16>, vector<8x4xf32> -> vector<8x4xf32>
    %c0_15 = arith.constant 0 : index
    %c0_16 = arith.constant 0 : index
    %19 = vector.load %arg7[%c0_15, %c0_16] : memref<1x4xf32, #tpu.memory_space<vmem>>, vector<1x4xf32>
    %20 = vector.broadcast %19 : vector<1x4xf32> to vector<8x4xf32>
    %21 = arith.addf %18, %20 : vector<8x4xf32>
    %c0_17 = arith.constant 0 : index
    %c0_18 = arith.constant 0 : index
    %22 = vector.load %arg8[%c0_17, %c0_18] : memref<8x4xf32, #tpu.memory_space<vmem>>, vector<8x4xf32>
    tpu.vector_store %arg8[%c0_17, %c0_18], %21 {strides = array<i32>} : memref<8x4xf32, #tpu.memory_space<vmem>>, vector<8x4xf32>,
    return
  }
  func.func @transform_0(%arg0: i32) -> (i32, i32) {
    %c0_i32 = arith.constant 0 : i32
    %c0_i32_0 = arith.constant 0 : i32
    return %arg0, %c0_i32 : i32, i32
  }
  func.func @transform_1(%arg0: i32) -> (i32, i32) {
    %c0_i32 = arith.constant 0 : i32
    %c0_i32_0 = arith.constant 0 : i32
    %c0_i32_1 = arith.constant 0 : i32
    return %c0_i32, %c0_i32_0 : i32, i32
  }
  func.func @transform_2(%arg0: i32) -> (i32, i32) {
    %c0_i32 = arith.constant 0 : i32
    %c0_i32_0 = arith.constant 0 : i32
    %c0_i32_1 = arith.constant 0 : i32
    return %c0_i32, %c0_i32_0 : i32, i32
  }
  func.func @transform_3(%arg0: i32) -> (i32, i32) {
    %c0_i32 = arith.constant 0 : i32
    %c0_i32_0 = arith.constant 0 : i32
    %c0_i32_1 = arith.constant 0 : i32
    return %c0_i32, %c0_i32_0 : i32, i32
  }
  func.func @transform_4(%arg0: i32) -> (i32, i32) {
    %c0_i32 = arith.constant 0 : i32
    %c0_i32_0 = arith.constant 0 : i32
    %c0_i32_1 = arith.constant 0 : i32
    return %c0_i32, %c0_i32_0 : i32, i32
  }
  func.func @transform_5(%arg0: i32) -> (i32, i32) {
    %c0_i32 = arith.constant 0 : i32
    %c0_i32_0 = arith.constant 0 : i32
    %c0_i32_1 = arith.constant 0 : i32
    return %c0_i32, %c0_i32_0 : i32, i32
  }
  func.func @transform_6(%arg0: i32) -> (i32, i32) {
    %c0_i32 = arith.constant 0 : i32
    %c0_i32_0 = arith.constant 0 : i32
    %c0_i32_1 = arith.constant 0 : i32
    return %c0_i32, %c0_i32_0 : i32, i32
  }
  func.func @transform_7(%arg0: i32) -> (i32, i32) {
    %c0_i32 = arith.constant 0 : i32
    %c0_i32_0 = arith.constant 0 : i32
    return %arg0, %c0_i32 : i32, i32
  }
}

</mosaic_0001>

<llo_original>
// kernel: dqn_forward.1
$region0: #{dqn_forward.1}
  #allocation0 [shape = 'u32[]', space=smem, size = 0x4, offset = 0x4, fixed_abs, tag = 'smem constant byte address 0x4 - core index']
  #allocation1 [shape = 'u32[144,128]{1,0:T(1,128)}', space=vmem, size = 0x12000, scoped, tag = 'internal scratch']
  %s0 = inlined_call_operand.vmem [shape: bf16[8,16], index: 0, kind: input, shape index: {}]
  %s1 = inlined_call_operand.vmem [shape: bf16[16,32], index: 1, kind: input, shape index: {}]
  %s2 = inlined_call_operand.vmem [shape: f32[1,32], index: 2, kind: input, shape index: {}]
  %s3 = inlined_call_operand.vmem [shape: bf16[32,32], index: 3, kind: input, shape index: {}]
  %s4 = inlined_call_operand.vmem [shape: f32[1,32], index: 4, kind: input, shape index: {}]
  %s5 = inlined_call_operand.vmem [shape: bf16[32,4], index: 5, kind: input, shape index: {}]
  %s6 = inlined_call_operand.vmem [shape: f32[1,4], index: 6, kind: input, shape index: {}]
  %s7 = inlined_call_operand.vmem [shape: f32[8,4], index: 7, kind: output, shape index: {}]
  %s8 = sld [smem:[#allocation0]]
  $region38: #{dqn_forward.1} parent=0
    _
  %s10 = ssub.s32 1, %s8
  %s11 = scalar_select 0, %s10, %s8
  // Predicated region
  $region2: #{dqn_forward.1} parent=0 // pred_check
    _
  $region3: #{dqn_forward.1} parent=0 // pred_check_branch
    %13 = sbr.rel (0) target = $region5
  $region4: #{dqn_forward.1} parent=0 // pred_region
    _
  $region5: #{dqn_forward.1} parent=0 // pred_fallthru
    _
  // Predicated region
  $region6: #{dqn_forward.1} parent=0 // pred_check
    _
  $region7: #{dqn_forward.1} parent=0 // pred_check_branch
    %15 = sbr.rel (0) target = $region9
  $region8: #{dqn_forward.1} parent=0 // pred_region
    _
  $region9: #{dqn_forward.1} parent=0 // pred_fallthru
    _
  // Predicated region
  $region10: #{dqn_forward.1} parent=0 // pred_check
    _
  $region11: #{dqn_forward.1} parent=0 // pred_check_branch
    %17 = sbr.rel (0) target = $region13
  $region12: #{dqn_forward.1} parent=0 // pred_region
    _
  $region13: #{dqn_forward.1} parent=0 // pred_fallthru
    _
  // Predicated region
  $region14: #{dqn_forward.1} parent=0 // pred_check
    _
  $region15: #{dqn_forward.1} parent=0 // pred_check_branch
    %19 = sbr.rel (0) target = $region17
  $region16: #{dqn_forward.1} parent=0 // pred_region
    _
  $region17: #{dqn_forward.1} parent=0 // pred_fallthru
    _
  // Predicated region
  $region18: #{dqn_forward.1} parent=0 // pred_check
    _
  $region19: #{dqn_forward.1} parent=0 // pred_check_branch
    %21 = sbr.rel (0) target = $region21
  $region20: #{dqn_forward.1} parent=0 // pred_region
    _
  $region21: #{dqn_forward.1} parent=0 // pred_fallthru
    _
  // Predicated region
  $region22: #{dqn_forward.1} parent=0 // pred_check
    _
  $region23: #{dqn_forward.1} parent=0 // pred_check_branch
    %23 = sbr.rel (0) target = $region25
  $region24: #{dqn_forward.1} parent=0 // pred_region
    _
  $region25: #{dqn_forward.1} parent=0 // pred_fallthru
    _
  // Predicated region
  $region26: #{dqn_forward.1} parent=0 // pred_check
    _
  $region27: #{dqn_forward.1} parent=0 // pred_check_branch
    %25 = sbr.rel (0) target = $region29
  $region28: #{dqn_forward.1} parent=0 // pred_region
    _
  $region29: #{dqn_forward.1} parent=0 // pred_fallthru
    _
  %v27 = vld [vmem:[%s0] sm:$0xf]
  %v28 = vld [vmem:[%s1] sm:$0xf]
  %v29 = vld [vmem:[%s1 + $0x4] sm:$0xf]
  %v30 = vld [vmem:[%s2] sm:$0x1]
  %v32 = vlaneseq
  %v33 = vshrl.u32 %v32, 7
  %v34 = vsub.s32 0, %v33
  %v35 = vrot.slane %v30, %v34
  %v39 = vunpack.c.l.b16 %v28
  %v40 = vunpack.c.l.b16 %v29
  %v41 = vpack.c.b16 %v40, %v39
  %vm43 = vcmask 130048
  %v45 = vsel %vm43, %v27, 0
  %47 = vmatprep.subr.bf16.mxu0 0
  %48 = vmatpush1.bf16.msra.mxu0 %v41
  %49 = vmatprep.subr.bf16.mxu0 0
  %50 = vmatpush1.bf16.msra.mxu0 0
  %51 = vmatprep.subr.bf16.mxu0 0
  %52 = vmatpush1.bf16.msra.mxu0 0
  %53 = vmatprep.subr.bf16.mxu0 0
  %54 = vmatpush1.bf16.msra.mxu0 0
  %55 = vmatprep.subr.bf16.mxu0 0
  %56 = vmatpush1.bf16.msra.mxu0 0
  %57 = vmatprep.subr.bf16.mxu0 0
  %58 = vmatpush1.bf16.msra.mxu0 0
  %59 = vmatprep.subr.bf16.mxu0 0
  %60 = vmatpush1.bf16.msra.mxu0 0
  %61 = vmatprep.subr.bf16.mxu0 0
  %62 = vmatpush1.bf16.msra.mxu0 0
  %63 = vmatprep.subr.bf16.mxu0 0
  %64 = vmatpush1.bf16.msra.mxu0 0
  %65 = vmatprep.subr.bf16.mxu0 0
  %66 = vmatpush1.bf16.msra.mxu0 0
  %67 = vmatprep.subr.bf16.mxu0 0
  %68 = vmatpush1.bf16.msra.mxu0 0
  %69 = vmatprep.subr.bf16.mxu0 0
  %70 = vmatpush1.bf16.msra.mxu0 0
  %71 = vmatprep.subr.bf16.mxu0 0
  %72 = vmatpush1.bf16.msra.mxu0 0
  %73 = vmatprep.subr.bf16.mxu0 0
  %74 = vmatpush1.bf16.msra.mxu0 0
  %75 = vmatprep.subr.bf16.mxu0 0
  %76 = vmatpush1.bf16.msra.mxu0 0
  %77 = vmatprep.subr.bf16.mxu0 0
  %78 = vmatpush1.bf16.msra.mxu0 0
  %79 = vmatprep.mubr.bf16.mxu0 0
  %80 = vmatmul.mubr.bf16.gmra.mrb[0].mxu0 %v45
  %v81 = vpop.f32.mrb[0].mxu0
  %v82 = vadd.f32 %v35, %v81
  %v83 = vpop.f32.mrb[0].mxu0
  %v84 = vpop.f32.mrb[0].mxu0
  %v85 = vpop.f32.mrb[0].mxu0
  %86 = vdwg.mxu0
  %v87 = vmax.f32 %v82, 0.0
  %v88 = vpack.c.bf16 %v87, %v87
  %v89 = vld [vmem:[%s3] sm:$0xf]
  %v90 = vld [vmem:[%s3 + $0x4] sm:$0xf]
  %v91 = vld [vmem:[%s3 + $0x8] sm:$0xf]
  %v92 = vld [vmem:[%s3 + $0xc] sm:$0xf]
  %v93 = vld [vmem:[%s4] sm:$0x1]
  %v95 = vlaneseq
  %v96 = vshrl.u32 %v95, 7
  %v97 = vsub.s32 0, %v96
  %v98 = vrot.slane %v93, %v97
  %v104 = vunpack.c.l.b16 %v89
  %v105 = vunpack.c.l.b16 %v90
  %v106 = vunpack.c.l.b16 %v91
  %v107 = vunpack.c.l.b16 %v92
  %v108 = vpack.c.b16 %v105, %v104
  %v109 = vpack.c.b16 %v107, %v106
  %vm112 = vcmask 261120
  %v114 = vsel %vm112, %v88, 0
  %116 = vmatprep.subr.bf16.mxu0 0
  %117 = vmatpush1.bf16.msra.mxu0 %v108
  %118 = vmatprep.subr.bf16.mxu0 0
  %119 = vmatpush1.bf16.msra.mxu0 %v109
  %120 = vmatprep.subr.bf16.mxu0 0
  %121 = vmatpush1.bf16.msra.mxu0 0
  %122 = vmatprep.subr.bf16.mxu0 0
  %123 = vmatpush1.bf16.msra.mxu0 0
  %124 = vmatprep.subr.bf16.mxu0 0
  %125 = vmatpush1.bf16.msra.mxu0 0
  %126 = vmatprep.subr.bf16.mxu0 0
  %127 = vmatpush1.bf16.msra.mxu0 0
  %128 = vmatprep.subr.bf16.mxu0 0
  %129 = vmatpush1.bf16.msra.mxu0 0
  %130 = vmatprep.subr.bf16.mxu0 0
  %131 = vmatpush1.bf16.msra.mxu0 0
  %132 = vmatprep.subr.bf16.mxu0 0
  %133 = vmatpush1.bf16.msra.mxu0 0
  %134 = vmatprep.subr.bf16.mxu0 0
  %135 = vmatpush1.bf16.msra.mxu0 0
  %136 = vmatprep.subr.bf16.mxu0 0
  %137 = vmatpush1.bf16.msra.mxu0 0
  %138 = vmatprep.subr.bf16.mxu0 0
  %139 = vmatpush1.bf16.msra.mxu0 0
  %140 = vmatprep.subr.bf16.mxu0 0
  %141 = vmatpush1.bf16.msra.mxu0 0
  %142 = vmatprep.subr.bf16.mxu0 0
  %143 = vmatpush1.bf16.msra.mxu0 0
  %144 = vmatprep.subr.bf16.mxu0 0
  %145 = vmatpush1.bf16.msra.mxu0 0
  %146 = vmatprep.subr.bf16.mxu0 0
  %147 = vmatpush1.bf16.msra.mxu0 0
  %148 = vmatprep.mubr.bf16.mxu0 0
  %149 = vmatmul.mubr.bf16.gmra.mrb[0].mxu0 %v114
  %v150 = vpop.f32.mrb[0].mxu0
  %v151 = vadd.f32 %v98, %v150
  %v152 = vpop.f32.mrb[0].mxu0
  %v153 = vpop.f32.mrb[0].mxu0
  %v154 = vpop.f32.mrb[0].mxu0
  %155 = vdwg.mxu0
  %v156 = vmax.f32 %v151, 0.0
  %v157 = vpack.c.bf16 %v156, %v156
  %v158 = vld [vmem:[%s5] sm:$0xf]
  %v159 = vld [vmem:[%s5 + $0x4] sm:$0xf]
  %v160 = vld [vmem:[%s5 + $0x8] sm:$0xf]
  %v161 = vld [vmem:[%s5 + $0xc] sm:$0xf]
  %v162 = vld [vmem:[%s6] sm:$0x1]
  %v164 = vlaneseq
  %v165 = vshrl.u32 %v164, 7
  %v166 = vsub.s32 0, %v165
  %v167 = vrot.slane %v162, %v166
  %v173 = vunpack.c.l.b16 %v158
  %v174 = vunpack.c.l.b16 %v159
  %v175 = vunpack.c.l.b16 %v160
  %v176 = vunpack.c.l.b16 %v161
  %v177 = vpack.c.b16 %v174, %v173
  %v178 = vpack.c.b16 %v176, %v175
  %v182 = vsel %vm112, %v157, 0
  %184 = vmatprep.subr.bf16.mxu0 0
  %185 = vmatpush1.bf16.msra.mxu0 %v177
  %186 = vmatprep.subr.bf16.mxu0 0
  %187 = vmatpush1.bf16.msra.mxu0 %v178
  %188 = vmatprep.subr.bf16.mxu0 0
  %189 = vmatpush1.bf16.msra.mxu0 0
  %190 = vmatprep.subr.bf16.mxu0 0
  %191 = vmatpush1.bf16.msra.mxu0 0
  %192 = vmatprep.subr.bf16.mxu0 0
  %193 = vmatpush1.bf16.msra.mxu0 0
  %194 = vmatprep.subr.bf16.mxu0 0
  %195 = vmatpush1.bf16.msra.mxu0 0
  %196 = vmatprep.subr.bf16.mxu0 0
  %197 = vmatpush1.bf16.msra.mxu0 0
  %198 = vmatprep.subr.bf16.mxu0 0
  %199 = vmatpush1.bf16.msra.mxu0 0
  %200 = vmatprep.subr.bf16.mxu0 0
  %201 = vmatpush1.bf16.msra.mxu0 0
  %202 = vmatprep.subr.bf16.mxu0 0
  %203 = vmatpush1.bf16.msra.mxu0 0
  %204 = vmatprep.subr.bf16.mxu0 0
  %205 = vmatpush1.bf16.msra.mxu0 0
  %206 = vmatprep.subr.bf16.mxu0 0
  %207 = vmatpush1.bf16.msra.mxu0 0
  %208 = vmatprep.subr.bf16.mxu0 0
  %209 = vmatpush1.bf16.msra.mxu0 0
  %210 = vmatprep.subr.bf16.mxu0 0
  %211 = vmatpush1.bf16.msra.mxu0 0
  %212 = vmatprep.subr.bf16.mxu0 0
  %213 = vmatpush1.bf16.msra.mxu0 0
  %214 = vmatprep.subr.bf16.mxu0 0
  %215 = vmatpush1.bf16.msra.mxu0 0
  %216 = vmatprep.mubr.bf16.mxu0 0
  %217 = vmatmul.mubr.bf16.gmra.mrb[0].mxu0 %v182
  %v218 = vpop.f32.mrb[0].mxu0
  %v219 = vadd.f32 %v167, %v218
  %v220 = vpop.f32.mrb[0].mxu0
  %v221 = vpop.f32.mrb[0].mxu0
  %v222 = vpop.f32.mrb[0].mxu0
  %223 = vdwg.mxu0
  %vm224 = vcmask 31744
  %225 = vst.msk [vmem:[%s7] sm:$0xff] %vm224, %v219
  // Predicated region
  $region30: #{dqn_forward.1} parent=0 // pred_check
    _
  $region31: #{dqn_forward.1} parent=0 // pred_check_branch
    %227 = sbr.rel (0) target = $region33
  $region32: #{dqn_forward.1} parent=0 // pred_region
    _
  $region33: #{dqn_forward.1} parent=0 // pred_fallthru
    _
  // Predicated region
  $region34: #{dqn_forward.1} parent=0 // pred_check
    _
  $region35: #{dqn_forward.1} parent=0 // pred_check_branch
    %229 = sbr.rel (0) target = $region37
  $region36: #{dqn_forward.1} parent=0 // pred_region
    _
  $region37: #{dqn_forward.1} parent=0 // pred_fallthru
    _

</llo_original>
